<compile_context>
chip_gen: v7x
topology: tpu7x:2x2x1
jax: 0.10.0
libtpu: 0.0.40
codegen_flags: <defaults>
</compile_context>

<pallas_src>
import math
import jax
import jax.numpy as jnp
from jax.experimental import pallas as pl
from jax.experimental.pallas import tpu as pltpu


def _round_up(x, m):
    return ((x + m - 1) // m) * m


def _predict_kernel(x_ref, t_ref,
                    w1_ref, bias_ref,            # bias_ref rows: [b1, center_param, b2]
                    w2h_ref, w2t_ref,
                    w3_ref, b3_ref,
                    o_ref):
    x = x_ref[...]                                # (tb, num_inputs)
    traits = t_ref[...]                           # (tb, 4)

    b1 = bias_ref[0:1, :]                         # (1, hidden)
    cp = bias_ref[1:2, :]                         # (1, hidden)  LayerNorm center_param
    b2 = bias_ref[2:3, :]                         # (1, hidden)

    # linear1 (MXU, f32 accumulation)
    h = jnp.dot(x, w1_ref[...], preferred_element_type=jnp.float32) + b1

    # LayerNorm (center=True, scale=False):
    #   mean over last dim, *unbiased* std (torch.std default), eps added to std
    n = h.shape[-1]
    mean = jnp.mean(h, axis=-1, keepdims=True)
    diff = h - mean
    var_unbiased = jnp.sum(diff * diff, axis=-1, keepdims=True) * (1.0 / (n - 1))
    std = jnp.sqrt(var_unbiased)
    inv = pl.reciprocal(std + 1e-6, approx=False)  # EUP; exact to keep 1e-4 tolerance
    h = diff * inv + cp

    # relu
    h = jnp.maximum(h, 0.0)

    # linear2 on concat([h, traits]) == h @ W2h + traits @ W2t + b2.
    # The K=4 traits contraction is done as 4 broadcast multiply-adds on the VPU
    # (avoids a padded MXU push per grid step).
    w2t = w2t_ref[...]                            # (4, hidden)
    trait_term = (traits[:, 0:1] * w2t[0:1, :]
                  + traits[:, 1:2] * w2t[1:2, :]
                  + traits[:, 2:3] * w2t[2:3, :]
                  + traits[:, 3:4] * w2t[3:4, :])
    h2 = jnp.dot(h, w2h_ref[...], preferred_element_type=jnp.float32) + trait_term + b2
    h2 = jnp.maximum(h2, 0.0)

    # last_fc (W3 is zero-padded to a lane-dense output width; extra cols sliced
    # away in the wrapper). Full-width unmasked stores on the output block.
    o_ref[...] = (jnp.dot(h2, w3_ref[...], preferred_element_type=jnp.float32)
                  + b3_ref[...])


def predict_net_withtrait_forward(x, traits, params, *, tb=512):
    """x: (B, num_inputs), traits: (B, 4) -> (B, num_outputs)."""
    B, num_inputs = x.shape
    hidden = params["w1"].shape[1]
    num_outputs = params["w3"].shape[1]

    # Large tile by default; clamp to the (8-rounded) batch so tiny batches do
    # not pay for a full tile of padding. Ragged batches are zero-padded.
    tb = max(8, min(tb, _round_up(B, 8)))
    b_pad = _round_up(B, tb)
    no_pad = _round_up(max(num_outputs, 128), 128)     # lane-dense output width

    if b_pad != B:
        x = jnp.pad(x, ((0, b_pad - B), (0, 0)))
        traits = jnp.pad(traits, ((0, b_pad - B), (0, 0)))

    # Pack the three (1, hidden) vectors into one input; pad W3/b3 to no_pad.
    bias_pack = jnp.concatenate([params["b1"], params["cp"], params["b2"]], axis=0)
    w3p = jnp.pad(params["w3"], ((0, 0), (0, no_pad - num_outputs)))
    b3p = jnp.pad(params["b3"], ((0, 0), (0, no_pad - num_outputs)))

    full = lambda shape: pl.BlockSpec(shape, lambda i: (0, 0))

    weight_bytes = 4 * (num_inputs * hidden + hidden * hidden + 4 * hidden
                        + hidden * no_pad + 3 * hidden + no_pad)
    cost = pl.CostEstimate(
        flops=2 * b_pad * (num_inputs * hidden + hidden * hidden
                           + 4 * hidden + hidden * no_pad),
        transcendentals=2 * b_pad,                       # sqrt + reciprocal per row
        bytes_accessed=4 * b_pad * (num_inputs + 4 + no_pad) + weight_bytes,
    )

    out = pl.pallas_call(
        _predict_kernel,
        out_shape=jax.ShapeDtypeStruct((b_pad, no_pad), jnp.float32),
        grid_spec=pltpu.PrefetchScalarGridSpec(
            num_scalar_prefetch=0,
            grid=(b_pad // tb,),
            in_specs=[
                pl.BlockSpec((tb, num_inputs), lambda i: (i, 0)),   # x
                pl.BlockSpec((tb, 4), lambda i: (i, 0)),            # traits
                full((num_inputs, hidden)),                         # W1
                full((3, hidden)),                                  # [b1; cp; b2]
                full((hidden, hidden)),                             # W2h
                full((4, hidden)),                                  # W2t
                full((hidden, no_pad)),                             # W3 (padded)
                full((1, no_pad)),                                  # b3 (padded)
            ],
            out_specs=pl.BlockSpec((tb, no_pad), lambda i: (i, 0)),
        ),
        compiler_params=pltpu.CompilerParams(
            dimension_semantics=("parallel",),
            vmem_limit_bytes=32 * 1024 * 1024),
        cost_estimate=cost,
    )(x, traits, params["w1"], bias_pack, params["w2h"], params["w2t"], w3p, b3p)

    return out[:B, :num_outputs]


def _xavier_uniform(key, fan_in, fan_out):
    # torch.nn.init.xavier_uniform_ with gain=1 on a (out, in) weight;
    # we directly produce the transposed (in, out) matrix.
    bound = math.sqrt(6.0 / (fan_in + fan_out))
    return jax.random.uniform(key, (fan_in, fan_out), jnp.float32, -bound, bound)


def init_params(key, num_inputs, hidden_dim, num_outputs):
    k1, k2, k3 = jax.random.split(key, 3)
    w2_full = _xavier_uniform(k2, hidden_dim + 4, hidden_dim)        # (hidden+4, hidden)
    return {
        "w1": _xavier_uniform(k1, num_inputs, hidden_dim),
        "b1": jnp.zeros((1, hidden_dim), jnp.float32),
        "cp": jnp.zeros((1, hidden_dim), jnp.float32),               # LayerNorm center_param
        "w2h": w2_full[:hidden_dim, :],
        "w2t": w2_full[hidden_dim:, :],
        "b2": jnp.zeros((1, hidden_dim), jnp.float32),
        "w3": _xavier_uniform(k3, hidden_dim, num_outputs),
        "b3": jnp.zeros((1, num_outputs), jnp.float32),
    }


def reference_forward(x, traits, p):
    h = x @ p["w1"] + p["b1"]
    n = h.shape[-1]
    mean = h.mean(-1, keepdims=True)
    std = jnp.sqrt(((h - mean) ** 2).sum(-1, keepdims=True) / (n - 1))
    h = (h - mean) / (std + 1e-6) + p["cp"]
    h = jnp.maximum(h, 0.0)
    h = jnp.concatenate([h, traits], axis=-1)
    h = jnp.maximum(h @ jnp.concatenate([p["w2h"], p["w2t"]], 0) + p["b2"], 0.0)
    return h @ p["w3"] + p["b3"]


# TODO(synk): the module's Adam optimizer and get_log_p/update training helpers
# are host-side training utilities, not part of the forward pass; not kernelized.

if __name__ == "__main__":
    num_inputs, hidden_dim, num_outputs = 16, 32, 8
    batch = 16

    key = jax.random.PRNGKey(0)
    kp, kx, kt = jax.random.split(key, 3)
    params = init_params(kp, num_inputs, hidden_dim, num_outputs)
    x = jax.random.normal(kx, (batch, num_inputs), jnp.float32)
    traits = jax.random.normal(kt, (batch, 4), jnp.float32)

    out = predict_net_withtrait_forward(x, traits, params)
    out = jax.block_until_ready(out)

    ref = reference_forward(x, traits, params)
    assert out.shape == (batch, num_outputs)
    assert jnp.allclose(out, ref, atol=1e-4, rtol=1e-4)
    print("KERNEL_OK")
</pallas_src>

<mosaic_0001>
module attributes {stable_mosaic.version = 11 : i64} {
  func.func @_predict_kernel(%arg0: i32, %arg1: memref<16x16xf32, #tpu.memory_space<vmem>>, %arg2: memref<16x4xf32, #tpu.memory_space<vmem>>, %arg3: memref<16x32xf32, #tpu.memory_space<vmem>>, %arg4: memref<3x32xf32, #tpu.memory_space<vmem>>, %arg5: memref<32x32xf32, #tpu.memory_space<vmem>>, %arg6: memref<4x32xf32, #tpu.memory_space<vmem>>, %arg7: memref<32x128xf32, #tpu.memory_space<vmem>>, %arg8: memref<1x128xf32, #tpu.memory_space<vmem>>, %arg9: memref<16x128xf32, #tpu.memory_space<vmem>>) attributes {dimension_semantics = [#tpu.dimension_semantics<parallel>], iteration_bounds = array<i64: 1>, scalar_prefetch = 0 : i64, scratch_operands = 0 : i64, tpu.core_type = #tpu.core_type<tc>, window_params = [{transform_indices = @transform_0, window_bounds = array<i64: 16, 16>}, {transform_indices = @transform_1, window_bounds = array<i64: 16, 4>}, {pipeline_mode = #tpu.pipeline_mode<synchronous>, transform_indices = @transform_2, window_bounds = array<i64: 16, 32>}, {pipeline_mode = #tpu.pipeline_mode<synchronous>, transform_indices = @transform_3, window_bounds = array<i64: 3, 32>}, {pipeline_mode = #tpu.pipeline_mode<synchronous>, transform_indices = @transform_4, window_bounds = array<i64: 32, 32>}, {pipeline_mode = #tpu.pipeline_mode<synchronous>, transform_indices = @transform_5, window_bounds = array<i64: 4, 32>}, {pipeline_mode = #tpu.pipeline_mode<synchronous>, transform_indices = @transform_6, window_bounds = array<i64: 32, 128>}, {pipeline_mode = #tpu.pipeline_mode<synchronous>, transform_indices = @transform_7, window_bounds = array<i64: 1, 128>}, {transform_indices = @transform_8, window_bounds = array<i64: 16, 128>}]} {
    %c0 = arith.constant 0 : index
    %c0_0 = arith.constant 0 : index
    %0 = vector.load %arg1[%c0, %c0_0] : memref<16x16xf32, #tpu.memory_space<vmem>>, vector<16x16xf32>
    %c0_1 = arith.constant 0 : index
    %c0_2 = arith.constant 0 : index
    %1 = vector.load %arg2[%c0_1, %c0_2] : memref<16x4xf32, #tpu.memory_space<vmem>>, vector<16x4xf32>
    %c0_3 = arith.constant 0 : index
    %c0_4 = arith.constant 0 : index
    %2 = vector.load %arg4[%c0_3, %c0_4] : memref<3x32xf32, #tpu.memory_space<vmem>>, vector<1x32xf32>
    %c1 = arith.constant 1 : index
    %c0_5 = arith.constant 0 : index
    %3 = vector.load %arg4[%c1, %c0_5] : memref<3x32xf32, #tpu.memory_space<vmem>>, vector<1x32xf32>
    %c2 = arith.constant 2 : index
    %c0_6 = arith.constant 0 : index
    %4 = vector.load %arg4[%c2, %c0_6] : memref<3x32xf32, #tpu.memory_space<vmem>>, vector<1x32xf32>
    %c0_7 = arith.constant 0 : index
    %c0_8 = arith.constant 0 : index
    %5 = vector.load %arg3[%c0_7, %c0_8] : memref<16x32xf32, #tpu.memory_space<vmem>>, vector<16x32xf32>
    %cst = arith.constant dense<0.000000e+00> : vector<16x32xf32>
    %6 = tpu.matmul %0, %5, %cst {dimension_numbers = #tpu.dot_dimension_numbers<[1], [0], [0], [1], [0, 0, 1, 1], [], []>} : vector<16x16xf32>, vector<16x32xf32>, vector<16x32xf32> -> vector<16x32xf32>
    %7 = vector.broadcast %2 : vector<1x32xf32> to vector<16x32xf32>
    %8 = arith.addf %6, %7 : vector<16x32xf32>
    %cst_9 = arith.constant dense<0.000000e+00> : vector<16xf32>
    %9 = vector.multi_reduction <add>, %8, %cst_9 [1] : vector<16x32xf32> to vector<16xf32>
    %10 = vector.shape_cast %9 : vector<16xf32> to vector<16x1xf32>
    %cst_10 = arith.constant 3.200000e+01 : f32
    %11 = vector.broadcast %cst_10 : f32 to vector<16x1xf32>
    %12 = arith.divf %10, %11 : vector<16x1xf32>
    %13 = vector.broadcast %12 : vector<16x1xf32> to vector<16x32xf32>
    %14 = arith.subf %8, %13 : vector<16x32xf32>
    %15 = arith.mulf %14, %14 : vector<16x32xf32>
    %cst_11 = arith.constant dense<0.000000e+00> : vector<16xf32>
    %16 = vector.multi_reduction <add>, %15, %cst_11 [1] : vector<16x32xf32> to vector<16xf32>
    %17 = vector.shape_cast %16 : vector<16xf32> to vector<16x1xf32>
    %cst_12 = arith.constant 0.0322580636 : f32
    %18 = vector.broadcast %cst_12 : f32 to vector<16x1xf32>
    %19 = arith.mulf %17, %18 : vector<16x1xf32>
    %20 = math.sqrt %19 : vector<16x1xf32>
    %cst_13 = arith.constant 9.99999997E-7 : f32
    %21 = vector.broadcast %cst_13 : f32 to vector<16x1xf32>
    %22 = arith.addf %20, %21 : vector<16x1xf32>
    %23 = tpu.reciprocal %22 : vector<16x1xf32> -> vector<16x1xf32>
    %24 = vector.broadcast %23 : vector<16x1xf32> to vector<16x32xf32>
    %25 = arith.mulf %14, %24 : vector<16x32xf32>
    %26 = vector.broadcast %3 : vector<1x32xf32> to vector<16x32xf32>
    %27 = arith.addf %25, %26 : vector<16x32xf32>
    %cst_14 = arith.constant 0.000000e+00 : f32
    %28 = vector.broadcast %cst_14 : f32 to vector<16x32xf32>
    %29 = arith.maximumf %27, %28 : vector<16x32xf32>
    %c0_15 = arith.constant 0 : index
    %c0_16 = arith.constant 0 : index
    %30 = vector.load %arg6[%c0_15, %c0_16] : memref<4x32xf32, #tpu.memory_space<vmem>>, vector<4x32xf32>
    %31 = vector.extract_strided_slice %1 {offsets = [0, 0], sizes = [16, 1], strides = [1, 1]} : vector<16x4xf32> to vector<16x1xf32>
    %32 = vector.extract_strided_slice %30 {offsets = [0, 0], sizes = [1, 32], strides = [1, 1]} : vector<4x32xf32> to vector<1x32xf32>
    %33 = vector.broadcast %31 : vector<16x1xf32> to vector<16x32xf32>
    %34 = vector.broadcast %32 : vector<1x32xf32> to vector<16x32xf32>
    %35 = arith.mulf %33, %34 : vector<16x32xf32>
    %36 = vector.extract_strided_slice %1 {offsets = [0, 1], sizes = [16, 1], strides = [1, 1]} : vector<16x4xf32> to vector<16x1xf32>
    %37 = vector.extract_strided_slice %30 {offsets = [1, 0], sizes = [1, 32], strides = [1, 1]} : vector<4x32xf32> to vector<1x32xf32>
    %38 = vector.broadcast %36 : vector<16x1xf32> to vector<16x32xf32>
    %39 = vector.broadcast %37 : vector<1x32xf32> to vector<16x32xf32>
    %40 = arith.mulf %38, %39 : vector<16x32xf32>
    %41 = arith.addf %35, %40 : vector<16x32xf32>
    %42 = vector.extract_strided_slice %1 {offsets = [0, 2], sizes = [16, 1], strides = [1, 1]} : vector<16x4xf32> to vector<16x1xf32>
    %43 = vector.extract_strided_slice %30 {offsets = [2, 0], sizes = [1, 32], strides = [1, 1]} : vector<4x32xf32> to vector<1x32xf32>
    %44 = vector.broadcast %42 : vector<16x1xf32> to vector<16x32xf32>
    %45 = vector.broadcast %43 : vector<1x32xf32> to vector<16x32xf32>
    %46 = arith.mulf %44, %45 : vector<16x32xf32>
    %47 = arith.addf %41, %46 : vector<16x32xf32>
    %48 = vector.extract_strided_slice %1 {offsets = [0, 3], sizes = [16, 1], strides = [1, 1]} : vector<16x4xf32> to vector<16x1xf32>
    %49 = vector.extract_strided_slice %30 {offsets = [3, 0], sizes = [1, 32], strides = [1, 1]} : vector<4x32xf32> to vector<1x32xf32>
    %50 = vector.broadcast %48 : vector<16x1xf32> to vector<16x32xf32>
    %51 = vector.broadcast %49 : vector<1x32xf32> to vector<16x32xf32>
    %52 = arith.mulf %50, %51 : vector<16x32xf32>
    %53 = arith.addf %47, %52 : vector<16x32xf32>
    %c0_17 = arith.constant 0 : index
    %c0_18 = arith.constant 0 : index
    %54 = vector.load %arg5[%c0_17, %c0_18] : memref<32x32xf32, #tpu.memory_space<vmem>>, vector<32x32xf32>
    %cst_19 = arith.constant dense<0.000000e+00> : vector<16x32xf32>
    %55 = tpu.matmul %29, %54, %cst_19 {dimension_numbers = #tpu.dot_dimension_numbers<[1], [0], [0], [1], [0, 0, 1, 1], [], []>} : vector<16x32xf32>, vector<32x32xf32>, vector<16x32xf32> -> vector<16x32xf32>
    %56 = arith.addf %55, %53 : vector<16x32xf32>
    %57 = vector.broadcast %4 : vector<1x32xf32> to vector<16x32xf32>
    %58 = arith.addf %56, %57 : vector<16x32xf32>
    %cst_20 = arith.constant 0.000000e+00 : f32
    %59 = vector.broadcast %cst_20 : f32 to vector<16x32xf32>
    %60 = arith.maximumf %58, %59 : vector<16x32xf32>
    %c0_21 = arith.constant 0 : index
    %c0_22 = arith.constant 0 : index
    %61 = vector.load %arg7[%c0_21, %c0_22] : memref<32x128xf32, #tpu.memory_space<vmem>>, vector<32x128xf32>
    %cst_23 = arith.constant dense<0.000000e+00> : vector<16x128xf32>
    %62 = tpu.matmul %60, %61, %cst_23 {dimension_numbers = #tpu.dot_dimension_numbers<[1], [0], [0], [1], [0, 0, 1, 1], [], []>} : vector<16x32xf32>, vector<32x128xf32>, vector<16x128xf32> -> vector<16x128xf32>
    %c0_24 = arith.constant 0 : index
    %c0_25 = arith.constant 0 : index
    %63 = vector.load %arg8[%c0_24, %c0_25] : memref<1x128xf32, #tpu.memory_space<vmem>>, vector<1x128xf32>
    %64 = vector.broadcast %63 : vector<1x128xf32> to vector<16x128xf32>
    %65 = arith.addf %62, %64 : vector<16x128xf32>
    %c0_26 = arith.constant 0 : index
    %c0_27 = arith.constant 0 : index
    %66 = vector.load %arg9[%c0_26, %c0_27] : memref<16x128xf32, #tpu.memory_space<vmem>>, vector<16x128xf32>
    tpu.vector_store %arg9[%c0_26, %c0_27], %65 {strides = array<i32>} : memref<16x128xf32, #tpu.memory_space<vmem>>, vector<16x128xf32>,
    return
  }
  func.func @transform_0(%arg0: i32) -> (i32, i32) {
    %c0_i32 = arith.constant 0 : i32
    %c0_i32_0 = arith.constant 0 : i32
    return %arg0, %c0_i32 : i32, i32
  }
  func.func @transform_1(%arg0: i32) -> (i32, i32) {
    %c0_i32 = arith.constant 0 : i32
    %c0_i32_0 = arith.constant 0 : i32
    return %arg0, %c0_i32 : i32, i32
  }
  func.func @transform_2(%arg0: i32) -> (i32, i32) {
    %c0_i32 = arith.constant 0 : i32
    %c0_i32_0 = arith.constant 0 : i32
    %c0_i32_1 = arith.constant 0 : i32
    return %c0_i32, %c0_i32_0 : i32, i32
  }
  func.func @transform_3(%arg0: i32) -> (i32, i32) {
    %c0_i32 = arith.constant 0 : i32
    %c0_i32_0 = arith.constant 0 : i32
    %c0_i32_1 = arith.constant 0 : i32
    return %c0_i32, %c0_i32_0 : i32, i32
  }
  func.func @transform_4(%arg0: i32) -> (i32, i32) {
    %c0_i32 = arith.constant 0 : i32
    %c0_i32_0 = arith.constant 0 : i32
    %c0_i32_1 = arith.constant 0 : i32
    return %c0_i32, %c0_i32_0 : i32, i32
  }
  func.func @transform_5(%arg0: i32) -> (i32, i32) {
    %c0_i32 = arith.constant 0 : i32
    %c0_i32_0 = arith.constant 0 : i32
    %c0_i32_1 = arith.constant 0 : i32
    return %c0_i32, %c0_i32_0 : i32, i32
  }
  func.func @transform_6(%arg0: i32) -> (i32, i32) {
    %c0_i32 = arith.constant 0 : i32
    %c0_i32_0 = arith.constant 0 : i32
    %c0_i32_1 = arith.constant 0 : i32
    return %c0_i32, %c0_i32_0 : i32, i32
  }
  func.func @transform_7(%arg0: i32) -> (i32, i32) {
    %c0_i32 = arith.constant 0 : i32
    %c0_i32_0 = arith.constant 0 : i32
    %c0_i32_1 = arith.constant 0 : i32
    return %c0_i32, %c0_i32_0 : i32, i32
  }
  func.func @transform_8(%arg0: i32) -> (i32, i32) {
    %c0_i32 = arith.constant 0 : i32
    %c0_i32_0 = arith.constant 0 : i32
    return %arg0, %c0_i32 : i32, i32
  }
}

</mosaic_0001>

<llo_original>
// kernel: tpu_custom_call.1
$region0: #{tpu_custom_call.1}
  #allocation0 [shape = 'u32[]', space=smem, size = 0x4, offset = 0x4, fixed_abs, tag = 'smem constant byte address 0x4 - core index']
  #allocation1 [shape = 'u32[144,128]{1,0:T(1,128)}', space=vmem, size = 0x12000, scoped, tag = 'internal scratch']
  %s0 = inlined_call_operand.hbm [shape: f32[16,16], index: 0, kind: input, shape index: {}]
  %s1 = inlined_call_operand.vmem [shape: f32[16,4], index: 1, kind: input, shape index: {}]
  %s2 = inlined_call_operand.hbm [shape: f32[16,32], index: 2, kind: input, shape index: {}]
  %s3 = inlined_call_operand.hbm [shape: f32[3,32], index: 3, kind: input, shape index: {}]
  %s4 = inlined_call_operand.vmem [shape: f32[32,32], index: 4, kind: input, shape index: {}]
  %s5 = inlined_call_operand.vmem [shape: f32[4,32], index: 5, kind: input, shape index: {}]
  %s6 = inlined_call_operand.hbm [shape: f32[32,128], index: 6, kind: input, shape index: {}]
  %s7 = inlined_call_operand.vmem [shape: f32[1,128], index: 7, kind: input, shape index: {}]
  %s8 = inlined_call_operand.hbm [shape: f32[16,128], index: 8, kind: output, shape index: {}]
  %s9 = sld [smem:[#allocation0]]
  $region58: #{tpu_custom_call.1} parent=0
    _
  %s11 = ssub.s32 1, %s9
  %s12 = scalar_select 0, %s11, %s9
  $region1: #{tpu_custom_call.1} parent=0
    #allocation2 [shape = 'u8[8192]{0}', space=vmem, size = 0x2000, scoped, tag = 'input window, operand 0, single buffered']
    #allocation3 [shape = 's32[1]{0}', space=sflag, size = 0x4, scoped, tag = 'scoped memory for tpu_custom_call.1']
    #allocation4 [shape = 's32[1]{0}', space=sflag, size = 0x4, scoped, tag = 'scoped memory for tpu_custom_call.1']
    #allocation5 [shape = 'u8[8192]{0}', space=vmem, size = 0x2000, scoped, tag = 'input window, operand 2, single buffered']
    #allocation6 [shape = 's32[1]{0}', space=sflag, size = 0x4, scoped, tag = 'scoped memory for tpu_custom_call.1']
    #allocation7 [shape = 'u8[2048]{0}', space=vmem, size = 0x800, scoped, tag = 'input window, operand 3, single buffered']
    #allocation8 [shape = 'u8[16384]{0}', space=vmem, size = 0x4000, scoped, tag = 'input window, operand 6, single buffered']
    #allocation9 [shape = 's32[1]{0}', space=sflag, size = 0x4, scoped, tag = 'scoped memory for tpu_custom_call.1']
    #allocation10 [shape = 'u8[8192]{0}', space=vmem, size = 0x2000, scoped, tag = 'output window, operand 0, single buffered']
    %13 = vsyncpa [#allocation3], 0
    %14 = vsyncpa [#allocation6], 0
    %15 = vsyncpa [#allocation9], 0
    %16 = vsyncpa [#allocation4], 0
    // Predicated region
    $region2: #{tpu_custom_call.1} parent=1 // pred_check
      _
    $region3: #{tpu_custom_call.1} parent=1 // pred_check_branch
      %18 = sbr.rel (0) target = $region5
    $region4: #{tpu_custom_call.1} parent=1 // pred_region
      %s20 = ssub.s32 256, 256
      %21 = vsyncadd [#allocation3], %s20
      %s22 = sshll.u32 [#allocation2], 4
      %s23 = int_to_ptr.vmem [resolvable:$true] %s22
      %28 = dma.hbm_to_vmem [thread:$0]  %s0, 256, %s23, [#allocation3], 128, 128, 8
    $region5: #{tpu_custom_call.1} parent=1 // pred_fallthru
      _
    // Predicated region
    $region6: #{tpu_custom_call.1} parent=1 // pred_check
      _
    $region7: #{tpu_custom_call.1} parent=1 // pred_check_branch
      %30 = sbr.rel (0) target = $region9
    $region8: #{tpu_custom_call.1} parent=1 // pred_region
      _
    $region9: #{tpu_custom_call.1} parent=1 // pred_fallthru
      _
    // Predicated region
    $region10: #{tpu_custom_call.1} parent=1 // pred_check
      _
    $region11: #{tpu_custom_call.1} parent=1 // pred_check_branch
      %32 = sbr.rel (0) target = $region13
    $region12: #{tpu_custom_call.1} parent=1 // pred_region
      %s34 = ssub.s32 256, 256
      %35 = vsyncadd [#allocation6], %s34
      %s36 = sshll.u32 [#allocation5], 4
      %s37 = int_to_ptr.vmem [resolvable:$true] %s36
      %42 = dma.hbm_to_vmem [thread:$0]  %s2, 256, %s37, [#allocation6], 128, 128, 8
    $region13: #{tpu_custom_call.1} parent=1 // pred_fallthru
      _
    // Predicated region
    $region14: #{tpu_custom_call.1} parent=1 // pred_check
      _
    $region15: #{tpu_custom_call.1} parent=1 // pred_check_branch
      %44 = sbr.rel (0) target = $region17
    $region16: #{tpu_custom_call.1} parent=1 // pred_region
      %s46 = ssub.s32 64, 64
      %47 = vsyncadd [#allocation6], %s46
      %s49 = sshll.u32 [#allocation7], 4
      %s50 = int_to_ptr.vmem [resolvable:$true] %s49
      %52 = dma.hbm_to_vmem [thread:$0]  %s3, 64, %s50, [#allocation6]
    $region17: #{tpu_custom_call.1} parent=1 // pred_fallthru
      _
    // Predicated region
    $region18: #{tpu_custom_call.1} parent=1 // pred_check
      _
    $region19: #{tpu_custom_call.1} parent=1 // pred_check_branch
      %54 = sbr.rel (0) target = $region21
    $region20: #{tpu_custom_call.1} parent=1 // pred_region
      _
    $region21: #{tpu_custom_call.1} parent=1 // pred_fallthru
      _
    // Predicated region
    $region22: #{tpu_custom_call.1} parent=1 // pred_check
      _
    $region23: #{tpu_custom_call.1} parent=1 // pred_check_branch
      %56 = sbr.rel (0) target = $region25
    $region24: #{tpu_custom_call.1} parent=1 // pred_region
      _
    $region25: #{tpu_custom_call.1} parent=1 // pred_fallthru
      _
    // Predicated region
    $region26: #{tpu_custom_call.1} parent=1 // pred_check
      _
    $region27: #{tpu_custom_call.1} parent=1 // pred_check_branch
      %58 = sbr.rel (0) target = $region29
    $region28: #{tpu_custom_call.1} parent=1 // pred_region
      %s60 = ssub.s32 512, 512
      %61 = vsyncadd [#allocation9], %s60
      %s62 = sshll.u32 [#allocation8], 4
      %s63 = int_to_ptr.vmem [resolvable:$true] %s62
      %68 = dma.hbm_to_vmem [thread:$0]  %s6, 512, %s63, [#allocation9], 128, 128, 8
    $region29: #{tpu_custom_call.1} parent=1 // pred_fallthru
      _
    // Predicated region
    $region30: #{tpu_custom_call.1} parent=1 // pred_check
      _
    $region31: #{tpu_custom_call.1} parent=1 // pred_check_branch
      %70 = sbr.rel (0) target = $region33
    $region32: #{tpu_custom_call.1} parent=1 // pred_region
      _
    $region33: #{tpu_custom_call.1} parent=1 // pred_fallthru
      _
    // Predicated region
    $region34: #{tpu_custom_call.1} parent=1 // pred_check
      _
    $region35: #{tpu_custom_call.1} parent=1 // pred_check_branch
      %72 = sbr.rel (0) target = $region37
    $region36: #{tpu_custom_call.1} parent=1 // pred_region
      %73 = dma.done [#allocation3], 256
    $region37: #{tpu_custom_call.1} parent=1 // pred_fallthru
      _
    // Predicated region
    $region38: #{tpu_custom_call.1} parent=1 // pred_check
      _
    $region39: #{tpu_custom_call.1} parent=1 // pred_check_branch
      %75 = sbr.rel (0) target = $region41
    $region40: #{tpu_custom_call.1} parent=1 // pred_region
      %76 = dma.done [#allocation6], 256
    $region41: #{tpu_custom_call.1} parent=1 // pred_fallthru
      _
    // Predicated region
    $region42: #{tpu_custom_call.1} parent=1 // pred_check
      _
    $region43: #{tpu_custom_call.1} parent=1 // pred_check_branch
      %78 = sbr.rel (0) target = $region45
    $region44: #{tpu_custom_call.1} parent=1 // pred_region
      %79 = dma.done [#allocation6], 64
    $region45: #{tpu_custom_call.1} parent=1 // pred_fallthru
      _
    // Predicated region
    $region46: #{tpu_custom_call.1} parent=1 // pred_check
      _
    $region47: #{tpu_custom_call.1} parent=1 // pred_check_branch
      %81 = sbr.rel (0) target = $region49
    $region48: #{tpu_custom_call.1} parent=1 // pred_region
      %82 = dma.done [#allocation9], 512
    $region49: #{tpu_custom_call.1} parent=1 // pred_fallthru
      _
    %v83 = vld [vmem:[#allocation2] sm:$0xff]
    %v84 = vld [vmem:[#allocation2 + $0x8] sm:$0xff]
    %v85 = vld [vmem:[%s1] sm:$0xff]
    %v86 = vld [vmem:[%s1 + $0x8] sm:$0xff]
    %v87 = vld [vmem:[#allocation7] sm:$0x1]
    %v88 = vld [vmem:[#allocation7 + $0x1] sm:$0x1]
    %v89 = vld [vmem:[#allocation7 + $0x2] sm:$0x1]
    %v90 = vld [vmem:[#allocation5] sm:$0xff]
    %v91 = vld [vmem:[#allocation5 + $0x8] sm:$0xff]
    %v92 = vlaneseq
    %v93 = vshrl.u32 %v92, 7
    %v94 = vsub.s32 0, %v93
    %v95 = vrot.slane %v87, %v94
    %vm96 = vcmask 130048
    %v98 = vsel %vm96, %v83, 0
    %v101 = vsel %vm96, %v84, 0
    %103 = vmatprep.subr.mxu0 0.0
    %104 = vmatpush1.msra.mxu0 %v90
    %105 = vmatprep.subr.mxu0 0.0
    %106 = vmatpush1.msra.mxu0 %v91
    %107 = vmatprep.subr.mxu0 0.0
    %108 = vmatpush1.msra.mxu0 0.0
    %109 = vmatprep.subr.mxu0 0.0
    %110 = vmatpush1.msra.mxu0 0.0
    %111 = vmatprep.subr.mxu0 0.0
    %112 = vmatpush1.msra.mxu0 0.0
    %113 = vmatprep.subr.mxu0 0.0
    %114 = vmatpush1.msra.mxu0 0.0
    %115 = vmatprep.subr.mxu0 0.0
    %116 = vmatpush1.msra.mxu0 0.0
    %117 = vmatprep.subr.mxu0 0.0
    %118 = vmatpush1.msra.mxu0 0.0
    %119 = vmatprep.subr.mxu0 0.0
    %120 = vmatpush1.msra.mxu0 0.0
    %121 = vmatprep.subr.mxu0 0.0
    %122 = vmatpush1.msra.mxu0 0.0
    %123 = vmatprep.subr.mxu0 0.0
    %124 = vmatpush1.msra.mxu0 0.0
    %125 = vmatprep.subr.mxu0 0.0
    %126 = vmatpush1.msra.mxu0 0.0
    %127 = vmatprep.subr.mxu0 0.0
    %128 = vmatpush1.msra.mxu0 0.0
    %129 = vmatprep.subr.mxu0 0.0
    %130 = vmatpush1.msra.mxu0 0.0
    %131 = vmatprep.subr.mxu0 0.0
    %132 = vmatpush1.msra.mxu0 0.0
    %133 = vmatprep.subr.mxu0 0.0
    %134 = vmatpush1.msra.mxu0 0.0
    %135 = vmatprep.subr.mxu0 0.0
    %136 = vmatpush1.msra.mxu0 0.0
    %137 = vmatprep.subr.mxu0 0.0
    %138 = vmatpush1.msra.mxu0 0.0
    %139 = vmatprep.subr.mxu0 0.0
    %140 = vmatpush1.msra.mxu0 0.0
    %141 = vmatprep.subr.mxu0 0.0
    %142 = vmatpush1.msra.mxu0 0.0
    %143 = vmatprep.subr.mxu0 0.0
    %144 = vmatpush1.msra.mxu0 0.0
    %145 = vmatprep.subr.mxu0 0.0
    %146 = vmatpush1.msra.mxu0 0.0
    %147 = vmatprep.subr.mxu0 0.0
    %148 = vmatpush1.msra.mxu0 0.0
    %149 = vmatprep.subr.mxu0 0.0
    %150 = vmatpush1.msra.mxu0 0.0
    %151 = vmatprep.subr.mxu0 0.0
    %152 = vmatpush1.msra.mxu0 0.0
    %153 = vmatprep.subr.mxu0 0.0
    %154 = vmatpush1.msra.mxu0 0.0
    %155 = vmatprep.subr.mxu0 0.0
    %156 = vmatpush1.msra.mxu0 0.0
    %157 = vmatprep.subr.mxu0 0.0
    %158 = vmatpush1.msra.mxu0 0.0
    %159 = vmatprep.subr.mxu0 0.0
    %160 = vmatpush1.msra.mxu0 0.0
    %161 = vmatprep.subr.mxu0 0.0
    %162 = vmatpush1.msra.mxu0 0.0
    %163 = vmatprep.subr.mxu0 0.0
    %164 = vmatpush1.msra.mxu0 0.0
    %165 = vmatprep.subr.mxu0 0.0
    %166 = vmatpush1.msra.mxu0 0.0
    %167 = vmatprep.mubr.f32.mxu0 0.0
    %168 = vmatmul.mubr.f32.gmra.mrb[0].mxu0 %v98
    %v169 = vpop.f32.mrb[0].mxu0
    %v170 = vadd.f32 %v95, %v169
    %v171 = vpop.f32.mrb[0].mxu0
    %172 = vmatprep.mubr.f32.mxu0 0.0
    %173 = vmatmul.mubr.f32.gmra.mrb[0].mxu0 %v101
    %v174 = vpop.f32.mrb[0].mxu0
    %v175 = vadd.f32 %v95, %v174
    %v176 = vpop.f32.mrb[0].mxu0
    %177 = vdwg.mxu0
    %vm178 = vcmask 261120
    %v179 = vsel %vm178, %v170, 0.0
    %180 = vadd.xlane.f32.xlu0 %v179
    %v181 = vpop.xlane.xlu0 %180
    %v182 = vsel %vm178, %v175, 0.0
    %183 = vadd.xlane.f32.xlu0 %v182
    %v184 = vpop.xlane.xlu0 %183
    %v185 = vrcp.pop 32.0
    %v186 = vmul.f32 %v181, %v185
    %v187 = vmul.f32 %v184, %v185
    %v188 = vsub.f32 %v170, %v186
    %v189 = vsub.f32 %v175, %v187
    %v190 = vmul.f32 %v188, %v188
    %v191 = vmul.f32 %v189, %v189
    %v192 = vsel %vm178, %v190, 0.0
    %193 = vadd.xlane.f32.xlu0 %v192
    %v194 = vpop.xlane.xlu0 %193
    %v195 = vsel %vm178, %v191, 0.0
    %196 = vadd.xlane.f32.xlu0 %v195
    %v197 = vpop.xlane.xlu0 %196
    %v198 = vmul.f32 %v194, 0.032258064
    %v199 = vmul.f32 %v197, 0.032258064
    %v200 = vrsqrt.pop %v198
    %v201 = vmul.f32 %v198, %v200
    %vm202 = vcmp.eq.f32.partialorder %v198, inf
    %v203 = vsel %vm202, %v198, %v201
    %vm204 = vcmp.eq.f32.partialorder %v198, 0.0
    %v205 = vand.u32 %v198, 2147483648
    %v206 = vsel %vm204, %v205, %v203
    %v207 = vrsqrt.pop %v199
    %v208 = vmul.f32 %v199, %v207
    %vm209 = vcmp.eq.f32.partialorder %v199, inf
    %v210 = vsel %vm209, %v199, %v208
    %vm211 = vcmp.eq.f32.partialorder %v199, 0.0
    %v212 = vand.u32 %v199, 2147483648
    %v213 = vsel %vm211, %v212, %v210
    %v214 = vadd.f32 %v206, 1e-06
    %v215 = vadd.f32 %v213, 1e-06
    %v216 = vrcp.pop %v214
    %v217 = vrcp.pop %v215
    %v218 = vmul.f32 %v188, %v216
    %v219 = vmul.f32 %v189, %v217
    %v220 = vlaneseq
    %v221 = vshrl.u32 %v220, 7
    %v222 = vsub.s32 0, %v221
    %v223 = vrot.slane %v88, %v222
    %v224 = vadd.f32 %v218, %v223
    %v225 = vadd.f32 %v219, %v223
    %v226 = vmax.f32 %v224, 0.0
    %v227 = vmax.f32 %v225, 0.0
    %v228 = vld [vmem:[%s5] sm:$0xf]
    %230 = vset.pattern.permute.xlu0 0
    %231 = vperm.xlu0 %230, %v85
    %v232 = vpop.permute.xlu0 %231
    %235 = vset.pattern.permute.xlu0 0
    %236 = vperm.xlu0 %235, %v86
    %v237 = vpop.permute.xlu0 %236
    %v239 = vlaneseq
    %v240 = vshrl.u32 %v239, 7
    %v241 = vsub.s32 0, %v240
    %v242 = vrot.slane %v228, %v241
    %v243 = vmul.f32 %v232, %v242
    %v244 = vmul.f32 %v237, %v242
    %245 = vset.pattern.permute.xlu0 1
    %246 = vperm.xlu0 %245, %v85
    %v247 = vpop.permute.xlu0 %246
    %249 = vset.pattern.permute.xlu0 1
    %250 = vperm.xlu0 %249, %v86
    %v251 = vpop.permute.xlu0 %250
    %v253 = vlaneseq
    %v254 = vshrl.u32 %v253, 7
    %v255 = vsub.s32 1, %v254
    %v256 = vrot.slane %v228, %v255
    %v257 = vmul.f32 %v247, %v256
    %v258 = vmul.f32 %v251, %v256
    %v259 = vadd.f32 %v243, %v257
    %v260 = vadd.f32 %v244, %v258
    %261 = vset.pattern.permute.xlu0 2
    %262 = vperm.xlu0 %261, %v85
    %v263 = vpop.permute.xlu0 %262
    %265 = vset.pattern.permute.xlu0 2
    %266 = vperm.xlu0 %265, %v86
    %v267 = vpop.permute.xlu0 %266
    %v269 = vlaneseq
    %v270 = vshrl.u32 %v269, 7
    %v271 = vsub.s32 2, %v270
    %v272 = vrot.slane %v228, %v271
    %v273 = vmul.f32 %v263, %v272
    %v274 = vmul.f32 %v267, %v272
    %v275 = vadd.f32 %v259, %v273
    %v276 = vadd.f32 %v260, %v274
    %277 = vset.pattern.permute.xlu0 3
    %278 = vperm.xlu0 %277, %v85
    %v279 = vpop.permute.xlu0 %278
    %281 = vset.pattern.permute.xlu0 3
    %282 = vperm.xlu0 %281, %v86
    %v283 = vpop.permute.xlu0 %282
    %v285 = vlaneseq
    %v286 = vshrl.u32 %v285, 7
    %v287 = vsub.s32 3, %v286
    %v288 = vrot.slane %v228, %v287
    %v289 = vmul.f32 %v279, %v288
    %v290 = vmul.f32 %v283, %v288
    %v291 = vadd.f32 %v275, %v289
    %v292 = vadd.f32 %v276, %v290
    %v293 = vld [vmem:[%s4] sm:$0xff]
    %v294 = vld [vmem:[%s4 + $0x8] sm:$0xff]
    %v295 = vld [vmem:[%s4 + $0x10] sm:$0xff]
    %v296 = vld [vmem:[%s4 + $0x18] sm:$0xff]
    %v298 = vsel %vm178, %v226, 0
    %v301 = vsel %vm178, %v227, 0
    %303 = vmatprep.subr.mxu0 0.0
    %304 = vmatpush1.msra.mxu0 %v293
    %305 = vmatprep.subr.mxu0 0.0
    %306 = vmatpush1.msra.mxu0 %v294
    %307 = vmatprep.subr.mxu0 0.0
    %308 = vmatpush1.msra.mxu0 %v295
    %309 = vmatprep.subr.mxu0 0.0
    %310 = vmatpush1.msra.mxu0 %v296
    %311 = vmatprep.subr.mxu0 0.0
    %312 = vmatpush1.msra.mxu0 0.0
    %313 = vmatprep.subr.mxu0 0.0
    %314 = vmatpush1.msra.mxu0 0.0
    %315 = vmatprep.subr.mxu0 0.0
    %316 = vmatpush1.msra.mxu0 0.0
    %317 = vmatprep.subr.mxu0 0.0
    %318 = vmatpush1.msra.mxu0 0.0
    %319 = vmatprep.subr.mxu0 0.0
    %320 = vmatpush1.msra.mxu0 0.0
    %321 = vmatprep.subr.mxu0 0.0
    %322 = vmatpush1.msra.mxu0 0.0
    %323 = vmatprep.subr.mxu0 0.0
    %324 = vmatpush1.msra.mxu0 0.0
    %325 = vmatprep.subr.mxu0 0.0
    %326 = vmatpush1.msra.mxu0 0.0
    %327 = vmatprep.subr.mxu0 0.0
    %328 = vmatpush1.msra.mxu0 0.0
    %329 = vmatprep.subr.mxu0 0.0
    %330 = vmatpush1.msra.mxu0 0.0
    %331 = vmatprep.subr.mxu0 0.0
    %332 = vmatpush1.msra.mxu0 0.0
    %333 = vmatprep.subr.mxu0 0.0
    %334 = vmatpush1.msra.mxu0 0.0
    %335 = vmatprep.subr.mxu0 0.0
    %336 = vmatpush1.msra.mxu0 0.0
    %337 = vmatprep.subr.mxu0 0.0
    %338 = vmatpush1.msra.mxu0 0.0
    %339 = vmatprep.subr.mxu0 0.0
    %340 = vmatpush1.msra.mxu0 0.0
    %341 = vmatprep.subr.mxu0 0.0
    %342 = vmatpush1.msra.mxu0 0.0
    %343 = vmatprep.subr.mxu0 0.0
    %344 = vmatpush1.msra.mxu0 0.0
    %345 = vmatprep.subr.mxu0 0.0
    %346 = vmatpush1.msra.mxu0 0.0
    %347 = vmatprep.subr.mxu0 0.0
    %348 = vmatpush1.msra.mxu0 0.0
    %349 = vmatprep.subr.mxu0 0.0
    %350 = vmatpush1.msra.mxu0 0.0
    %351 = vmatprep.subr.mxu0 0.0
    %352 = vmatpush1.msra.mxu0 0.0
    %353 = vmatprep.subr.mxu0 0.0
    %354 = vmatpush1.msra.mxu0 0.0
    %355 = vmatprep.subr.mxu0 0.0
    %356 = vmatpush1.msra.mxu0 0.0
    %357 = vmatprep.subr.mxu0 0.0
    %358 = vmatpush1.msra.mxu0 0.0
    %359 = vmatprep.subr.mxu0 0.0
    %360 = vmatpush1.msra.mxu0 0.0
    %361 = vmatprep.subr.mxu0 0.0
    %362 = vmatpush1.msra.mxu0 0.0
    %363 = vmatprep.subr.mxu0 0.0
    %364 = vmatpush1.msra.mxu0 0.0
    %365 = vmatprep.subr.mxu0 0.0
    %366 = vmatpush1.msra.mxu0 0.0
    %367 = vmatprep.mubr.f32.mxu0 0.0
    %368 = vmatmul.mubr.f32.gmra.mrb[0].mxu0 %v298
    %v369 = vpop.f32.mrb[0].mxu0
    %v370 = vadd.f32 %v291, %v369
    %v371 = vpop.f32.mrb[0].mxu0
    %372 = vmatprep.mubr.f32.mxu0 0.0
    %373 = vmatmul.mubr.f32.gmra.mrb[0].mxu0 %v301
    %v374 = vpop.f32.mrb[0].mxu0
    %v375 = vadd.f32 %v292, %v374
    %v376 = vpop.f32.mrb[0].mxu0
    %377 = vdwg.mxu0
    %v378 = vlaneseq
    %v379 = vshrl.u32 %v378, 7
    %v380 = vsub.s32 0, %v379
    %v381 = vrot.slane %v89, %v380
    %v382 = vadd.f32 %v370, %v381
    %v383 = vadd.f32 %v375, %v381
    %v384 = vmax.f32 %v382, 0.0
    %v385 = vmax.f32 %v383, 0.0
    %v386 = vld [vmem:[#allocation8] sm:$0xff]
    %v387 = vld [vmem:[#allocation8 + $0x8] sm:$0xff]
    %v388 = vld [vmem:[#allocation8 + $0x10] sm:$0xff]
    %v389 = vld [vmem:[#allocation8 + $0x18] sm:$0xff]
    %v390 = vld [vmem:[%s7] sm:$0x1]
    %v392 = vlaneseq
    %v393 = vshrl.u32 %v392, 7
    %v394 = vsub.s32 0, %v393
    %v395 = vrot.slane %v390, %v394
    %v398 = vsel %vm178, %v384, 0
    %v401 = vsel %vm178, %v385, 0
    %403 = vmatprep.subr.mxu0 0.0
    %404 = vmatpush1.msra.mxu0 %v386
    %405 = vmatprep.subr.mxu0 0.0
    %406 = vmatpush1.msra.mxu0 %v387
    %407 = vmatprep.subr.mxu0 0.0
    %408 = vmatpush1.msra.mxu0 %v388
    %409 = vmatprep.subr.mxu0 0.0
    %410 = vmatpush1.msra.mxu0 %v389
    %411 = vmatprep.subr.mxu0 0.0
    %412 = vmatpush1.msra.mxu0 0.0
    %413 = vmatprep.subr.mxu0 0.0
    %414 = vmatpush1.msra.mxu0 0.0
    %415 = vmatprep.subr.mxu0 0.0
    %416 = vmatpush1.msra.mxu0 0.0
    %417 = vmatprep.subr.mxu0 0.0
    %418 = vmatpush1.msra.mxu0 0.0
    %419 = vmatprep.subr.mxu0 0.0
    %420 = vmatpush1.msra.mxu0 0.0
    %421 = vmatprep.subr.mxu0 0.0
    %422 = vmatpush1.msra.mxu0 0.0
    %423 = vmatprep.subr.mxu0 0.0
    %424 = vmatpush1.msra.mxu0 0.0
    %425 = vmatprep.subr.mxu0 0.0
    %426 = vmatpush1.msra.mxu0 0.0
    %427 = vmatprep.subr.mxu0 0.0
    %428 = vmatpush1.msra.mxu0 0.0
    %429 = vmatprep.subr.mxu0 0.0
    %430 = vmatpush1.msra.mxu0 0.0
    %431 = vmatprep.subr.mxu0 0.0
    %432 = vmatpush1.msra.mxu0 0.0
    %433 = vmatprep.subr.mxu0 0.0
    %434 = vmatpush1.msra.mxu0 0.0
    %435 = vmatprep.subr.mxu0 0.0
    %436 = vmatpush1.msra.mxu0 0.0
    %437 = vmatprep.subr.mxu0 0.0
    %438 = vmatpush1.msra.mxu0 0.0
    %439 = vmatprep.subr.mxu0 0.0
    %440 = vmatpush1.msra.mxu0 0.0
    %441 = vmatprep.subr.mxu0 0.0
    %442 = vmatpush1.msra.mxu0 0.0
    %443 = vmatprep.subr.mxu0 0.0
    %444 = vmatpush1.msra.mxu0 0.0
    %445 = vmatprep.subr.mxu0 0.0
    %446 = vmatpush1.msra.mxu0 0.0
    %447 = vmatprep.subr.mxu0 0.0
    %448 = vmatpush1.msra.mxu0 0.0
    %449 = vmatprep.subr.mxu0 0.0
    %450 = vmatpush1.msra.mxu0 0.0
    %451 = vmatprep.subr.mxu0 0.0
    %452 = vmatpush1.msra.mxu0 0.0
    %453 = vmatprep.subr.mxu0 0.0
    %454 = vmatpush1.msra.mxu0 0.0
    %455 = vmatprep.subr.mxu0 0.0
    %456 = vmatpush1.msra.mxu0 0.0
    %457 = vmatprep.subr.mxu0 0.0
    %458 = vmatpush1.msra.mxu0 0.0
    %459 = vmatprep.subr.mxu0 0.0
    %460 = vmatpush1.msra.mxu0 0.0
    %461 = vmatprep.subr.mxu0 0.0
    %462 = vmatpush1.msra.mxu0 0.0
    %463 = vmatprep.subr.mxu0 0.0
    %464 = vmatpush1.msra.mxu0 0.0
    %465 = vmatprep.subr.mxu0 0.0
    %466 = vmatpush1.msra.mxu0 0.0
    %467 = vmatprep.mubr.f32.mxu0 0.0
    %468 = vmatmul.mubr.f32.gmra.mrb[0].mxu0 %v398
    %v469 = vpop.f32.mrb[0].mxu0
    %v470 = vadd.f32 %v395, %v469
    %v471 = vpop.f32.mrb[0].mxu0
    %472 = vmatprep.mubr.f32.mxu0 0.0
    %473 = vmatmul.mubr.f32.gmra.mrb[0].mxu0 %v401
    %v474 = vpop.f32.mrb[0].mxu0
    %v475 = vadd.f32 %v395, %v474
    %v476 = vpop.f32.mrb[0].mxu0
    %477 = vdwg.mxu0
    %478 = vst [vmem:[#allocation10] sm:$0xff] %v470
    %479 = vst [vmem:[#allocation10 + $0x8] sm:$0xff] %v475
    // Predicated region
    $region50: #{tpu_custom_call.1} parent=1 // pred_check
      _
    $region51: #{tpu_custom_call.1} parent=1 // pred_check_branch
      %481 = sbr.rel (0) target = $region53
    $region52: #{tpu_custom_call.1} parent=1 // pred_region
      %s483 = ssub.s32 256, 256
      %484 = vsyncadd [#allocation4], %s483
      %s485 = sshll.u32 [#allocation10], 4
      %s486 = int_to_ptr.vmem [resolvable:$true] %s485
      %491 = dma.vmem_to_hbm [thread:$0]  %s486, 256, %s8, [#allocation4], 128, 128, 8
    $region53: #{tpu_custom_call.1} parent=1 // pred_fallthru
      _
    // Predicated region
    $region54: #{tpu_custom_call.1} parent=1 // pred_check
      _
    $region55: #{tpu_custom_call.1} parent=1 // pred_check_branch
      %493 = sbr.rel (0) target = $region57
    $region56: #{tpu_custom_call.1} parent=1 // pred_region
      %494 = dma.done [#allocation4], 256
    $region57: #{tpu_custom_call.1} parent=1 // pred_fallthru
      _
    %495 = vsyncpa [#allocation3], 1
    %496 = vsyncpa [#allocation6], 1
    %497 = vsyncpa [#allocation9], 1
    %498 = vsyncpa [#allocation4], 1

</llo_original>
